<compile_context>
chip_gen: v7x
topology: tpu7x:2x2x1
jax: 0.10.0
libtpu: 0.0.40
codegen_flags: <defaults>
</compile_context>

<pallas_src>
from functools import partial

import jax
import jax.numpy as jnp
from jax.experimental import pallas as pl
from jax.experimental.pallas import tpu as pltpu

BN_EPS = 1e-5
_LANE = 128
_SUBLANE_BF16 = 16  # bf16 packs 16 sublane-rows per vreg


def _round_up(x, m):
    return (x + m - 1) // m * m


def _vmem_limit_bytes():
    # Generation-aware VMEM cap: ~3/4 of physical per-core VMEM
    # (v5e/v6e: 128 MiB -> 96 MiB, v7x: 64 MiB -> 48 MiB).
    # Fall back to the v7x-safe 48 MiB if the query is unavailable.
    try:
        cap = int(pltpu.get_tpu_info().vmem_capacity_bytes)
    except Exception:
        cap = 64 * 1024 * 1024
    return max(32 * 1024 * 1024, min((cap * 3) // 4, 100 * 1024 * 1024))


_VMEM_LIMIT_BYTES = _vmem_limit_bytes()


# ---------------------------------------------------------------------------
# Fused kernel.
#   Step 0       : 4x (Linear -> train-mode BN -> ReLU) into bf16 scratch h4.
#   Every step j : one output-feature tile of the final Linear + Sigmoid.
# ---------------------------------------------------------------------------
def _generator_fused_kernel(
    x_ref, mask_ref,
    w1_ref, g1_ref, bt1_ref,
    w2_ref, g2_ref, bt2_ref,
    w3_ref, g3_ref, bt3_ref,
    w4_ref, g4_ref, bt4_ref,
    w5_ref, b5_ref,
    o_ref,
    h4_ref,
    *, inv_n, apply_row_mask,
):
    @pl.when(pl.program_id(0) == 0)
    def _hidden_stage():
        def lin_bn_relu(h_bf16, w_ref, g_ref, bt_ref):
            # Linear (bias omitted: exactly cancelled by train-mode BN mean
            # subtraction) -> BatchNorm1d with batch statistics -> ReLU -> bf16.
            y = jnp.dot(h_bf16, w_ref[...], preferred_element_type=jnp.float32)
            sum_y = jnp.sum(y, axis=0, keepdims=True)          # (1, D)
            sum_yy = jnp.sum(y * y, axis=0, keepdims=True)     # (1, D)
            mean = sum_y * inv_n
            var = sum_yy * inv_n - mean * mean                 # one-pass variance
            s = g_ref[...] * jax.lax.rsqrt(var + BN_EPS)       # folded scale
            b = bt_ref[...] - mean * s                         # folded shift
            a = jnp.maximum(y * s + b, 0.0)
            if apply_row_mask:
                # Zero the padded batch rows so next layer's batch stats stay exact.
                a = a * mask_ref[...]
            return a.astype(jnp.bfloat16)

        h = x_ref[...].astype(jnp.bfloat16)
        h = lin_bn_relu(h, w1_ref, g1_ref, bt1_ref)
        h = lin_bn_relu(h, w2_ref, g2_ref, bt2_ref)
        h = lin_bn_relu(h, w3_ref, g3_ref, bt3_ref)
        h4_ref[...] = lin_bn_relu(h, w4_ref, g4_ref, bt4_ref)

    # Final Linear + Sigmoid for this output-feature tile (lane-padded tail
    # lanes compute sigmoid(bias)=const -> accepted waste, sliced off outside).
    y = jnp.dot(h4_ref[...], w5_ref[...], preferred_element_type=jnp.float32) + b5_ref[...]
    o_ref[...] = jax.nn.sigmoid(y).astype(o_ref.dtype)


# ---------------------------------------------------------------------------
# Wrapper
# ---------------------------------------------------------------------------
@partial(jax.jit, static_argnames=("out_dtype",))
def generator_forward(params, noise, out_dtype=jnp.float32):
    # out_dtype=jnp.bfloat16 halves the output HBM writeback (biggest transfer,
    # especially on v5e) if the consumer tolerates it; f32 kept as the default.
    n, noise_dim = noise.shape
    blocks = params["blocks"]
    final = params["final"]
    d4 = blocks[-1]["w"].shape[1]
    d_out = final["w"].shape[1]

    d_pad = _round_up(d_out, _LANE)
    n_pad = _round_up(n, _SUBLANE_BF16)
    tn = 256 if d_pad % 256 == 0 else _LANE
    num_tiles = d_pad // tn
    apply_row_mask = n_pad != n

    # --- VMEM budget / max-batch ceiling (BN needs the full batch resident; the
    # batch axis must NOT be tiled, so a too-large batch must fail loudly). ----
    weight_bytes = sum(b["w"].shape[0] * b["w"].shape[1] * 2 for b in blocks)
    approx_vmem = (
        n_pad * (4 * d4 + 2 * d4)              # layer-4 f32 pre-act + bf16 h4 scratch
        + 2 * (n_pad * tn * 4 + d4 * tn * 2)   # double-buffered output / w5 tiles
        + 2 * weight_bytes                     # resident bf16 block weights
    )
    assert approx_vmem < _VMEM_LIMIT_BYTES, (
        f"Batch {n} too large for single-call BatchNorm generator "
        f"(~{approx_vmem} B needed, limit {_VMEM_LIMIT_BYTES} B); batch tiling "
        f"would change BatchNorm semantics, so reduce the batch instead."
    )

    # --- operands -------------------------------------------------------------
    x = noise
    if apply_row_mask:
        x = jnp.pad(x, ((0, n_pad - n), (0, 0)))
    row_mask = (jnp.arange(n_pad) < n).astype(jnp.float32).reshape(n_pad, 1)

    operands = [x, row_mask]
    for blk in blocks:
        operands += [
            blk["w"].astype(jnp.bfloat16),
            blk["gamma"].reshape(1, -1),
            blk["beta"].reshape(1, -1),
        ]
    w5 = final["w"].astype(jnp.bfloat16)
    b5 = final["b"].reshape(1, d_out).astype(jnp.float32)
    if d_pad != d_out:
        # Lane-pad the final layer so output stores are unmasked / 128-dense.
        w5 = jnp.pad(w5, ((0, 0), (0, d_pad - d_out)))
        b5 = jnp.pad(b5, ((0, 0), (0, d_pad - d_out)))
    operands += [w5, b5]

    # --- specs ------------------------------------------------------------------
    def resident(shape):
        # Constant block index across the grid -> loaded once, stays in VMEM.
        return pl.BlockSpec(shape, lambda j: (0,) * len(shape))

    in_specs = [resident(op.shape) for op in operands[:-2]] + [
        pl.BlockSpec((d4, tn), lambda j: (0, j)),   # w5 feature tile
        pl.BlockSpec((1, tn), lambda j: (0, j)),    # b5 feature tile
    ]

    kernel = partial(
        _generator_fused_kernel,
        inv_n=1.0 / float(n),
        apply_row_mask=apply_row_mask,
    )

    out = pl.pallas_call(
        kernel,
        out_shape=jax.ShapeDtypeStruct((n_pad, d_pad), out_dtype),
        grid=(num_tiles,),
        in_specs=in_specs,
        out_specs=pl.BlockSpec((n_pad, tn), lambda j: (0, j)),
        scratch_shapes=[pltpu.VMEM((n_pad, d4), jnp.bfloat16)],
        compiler_params=pltpu.CompilerParams(
            # "arbitrary": step 0 fills the shared h4 scratch, so the feature
            # axis must run sequentially on one core.
            dimension_semantics=("arbitrary",),
            vmem_limit_bytes=_VMEM_LIMIT_BYTES,
        ),
    )(*operands)
    return out[:n, :d_out]


# ---------------------------------------------------------------------------
# Parameter construction (deterministic, PyTorch-style uniform(-1/sqrt(in), ..))
# ---------------------------------------------------------------------------
def init_generator_params(key, noise_dim=10, image_dim=784, hidden_dim=128):
    dims = [noise_dim, hidden_dim, hidden_dim * 2, hidden_dim * 4, hidden_dim * 8]
    params = {"blocks": []}
    for i in range(4):
        d_in, d_out = dims[i], dims[i + 1]
        key, kw, kb, kg, kbeta = jax.random.split(key, 5)
        bound = 1.0 / jnp.sqrt(d_in)
        params["blocks"].append({
            "w": jax.random.uniform(kw, (d_in, d_out), jnp.float32, -bound, bound),
            "b": jax.random.uniform(kb, (d_out,), jnp.float32, -bound, bound),
            # Randomized BN affine params so the kernel's affine path is exercised.
            "gamma": 1.0 + 0.1 * jax.random.normal(kg, (d_out,), jnp.float32),
            "beta": 0.1 * jax.random.normal(kbeta, (d_out,), jnp.float32),
        })
    d_in, d_out = dims[-1], image_dim
    key, kw, kb = jax.random.split(key, 3)
    bound = 1.0 / jnp.sqrt(d_in)
    params["final"] = {
        "w": jax.random.uniform(kw, (d_in, d_out), jnp.float32, -bound, bound),
        "b": jax.random.uniform(kb, (d_out,), jnp.float32, -bound, bound),
    }
    return params


# ---------------------------------------------------------------------------
# Pure-JAX reference (full torch semantics, incl. the BN-block bias add).
# matmul_dtype=bfloat16 mirrors the kernel's MXU precision for a tight check.
# ---------------------------------------------------------------------------
def generator_reference(params, noise, matmul_dtype=jnp.float32):
    x = noise
    for blk in params["blocks"]:
        y = jnp.dot(x.astype(matmul_dtype), blk["w"].astype(matmul_dtype),
                    preferred_element_type=jnp.float32) + blk["b"]
        mean = jnp.mean(y, axis=0, keepdims=True)
        var = jnp.mean((y - mean) ** 2, axis=0, keepdims=True)
        y = (y - mean) / jnp.sqrt(var + BN_EPS)
        x = jnp.maximum(blk["gamma"] * y + blk["beta"], 0.0)
    y = jnp.dot(x.astype(matmul_dtype), params["final"]["w"].astype(matmul_dtype),
                preferred_element_type=jnp.float32) + params["final"]["b"]
    return jax.nn.sigmoid(y)


if __name__ == "__main__":
    # Small shapes consistent with the module's defaults (scaled down).
    # batch=8 also exercises the batch-padding (8 -> 16) + masked-stats path.
    batch = 8
    noise_dim = 10
    hidden_dim = 32
    image_dim = 64

    key = jax.random.PRNGKey(0)
    key, pkey, nkey = jax.random.split(key, 3)
    params = init_generator_params(
        pkey, noise_dim=noise_dim, image_dim=image_dim, hidden_dim=hidden_dim
    )
    noise = jax.random.normal(nkey, (batch, noise_dim), jnp.float32)

    out = jax.block_until_ready(generator_forward(params, noise))
    assert out.shape == (batch, image_dim), out.shape

    # Tight check vs a reference with matching bf16 matmul precision.
    ref_bf16 = generator_reference(params, noise, matmul_dtype=jnp.bfloat16)
    assert jnp.allclose(out, ref_bf16, atol=2e-3, rtol=2e-3), float(
        jnp.max(jnp.abs(out - ref_bf16)))

    # Loose check vs the full-f32 torch-semantics reference.
    ref_f32 = generator_reference(params, noise, matmul_dtype=jnp.float32)
    assert jnp.allclose(out, ref_f32, atol=5e-2), float(
        jnp.max(jnp.abs(out - ref_f32)))

    print("KERNEL_OK")
</pallas_src>

<mosaic_0001>
module attributes {stable_mosaic.version = 11 : i64} {
  func.func @_generator_fused_kernel(%arg0: i32, %arg1: memref<16x10xf32, #tpu.memory_space<vmem>>, %arg2: memref<16x1xf32, #tpu.memory_space<vmem>>, %arg3: memref<10x32xbf16, #tpu.memory_space<vmem>>, %arg4: memref<1x32xf32, #tpu.memory_space<vmem>>, %arg5: memref<1x32xf32, #tpu.memory_space<vmem>>, %arg6: memref<32x64xbf16, #tpu.memory_space<vmem>>, %arg7: memref<1x64xf32, #tpu.memory_space<vmem>>, %arg8: memref<1x64xf32, #tpu.memory_space<vmem>>, %arg9: memref<64x128xbf16, #tpu.memory_space<vmem>>, %arg10: memref<1x128xf32, #tpu.memory_space<vmem>>, %arg11: memref<1x128xf32, #tpu.memory_space<vmem>>, %arg12: memref<128x256xbf16, #tpu.memory_space<vmem>>, %arg13: memref<1x256xf32, #tpu.memory_space<vmem>>, %arg14: memref<1x256xf32, #tpu.memory_space<vmem>>, %arg15: memref<256x128xbf16, #tpu.memory_space<vmem>>, %arg16: memref<1x128xf32, #tpu.memory_space<vmem>>, %arg17: memref<16x128xf32, #tpu.memory_space<vmem>>, %arg18: memref<16x256xbf16, #tpu.memory_space<vmem>>) attributes {dimension_semantics = [#tpu.dimension_semantics<arbitrary>], iteration_bounds = array<i64: 1>, scalar_prefetch = 0 : i64, scratch_operands = 1 : i64, tpu.core_type = #tpu.core_type<tc>, window_params = [{pipeline_mode = #tpu.pipeline_mode<synchronous>, transform_indices = @transform_0, window_bounds = array<i64: 16, 10>}, {pipeline_mode = #tpu.pipeline_mode<synchronous>, transform_indices = @transform_1, window_bounds = array<i64: 16, 1>}, {pipeline_mode = #tpu.pipeline_mode<synchronous>, transform_indices = @transform_2, window_bounds = array<i64: 10, 32>}, {pipeline_mode = #tpu.pipeline_mode<synchronous>, transform_indices = @transform_3, window_bounds = array<i64: 1, 32>}, {pipeline_mode = #tpu.pipeline_mode<synchronous>, transform_indices = @transform_4, window_bounds = array<i64: 1, 32>}, {pipeline_mode = #tpu.pipeline_mode<synchronous>, transform_indices = @transform_5, window_bounds = array<i64: 32, 64>}, {pipeline_mode = #tpu.pipeline_mode<synchronous>, transform_indices = @transform_6, window_bounds = array<i64: 1, 64>}, {pipeline_mode = #tpu.pipeline_mode<synchronous>, transform_indices = @transform_7, window_bounds = array<i64: 1, 64>}, {pipeline_mode = #tpu.pipeline_mode<synchronous>, transform_indices = @transform_8, window_bounds = array<i64: 64, 128>}, {pipeline_mode = #tpu.pipeline_mode<synchronous>, transform_indices = @transform_9, window_bounds = array<i64: 1, 128>}, {pipeline_mode = #tpu.pipeline_mode<synchronous>, transform_indices = @transform_10, window_bounds = array<i64: 1, 128>}, {pipeline_mode = #tpu.pipeline_mode<synchronous>, transform_indices = @transform_11, window_bounds = array<i64: 128, 256>}, {pipeline_mode = #tpu.pipeline_mode<synchronous>, transform_indices = @transform_12, window_bounds = array<i64: 1, 256>}, {pipeline_mode = #tpu.pipeline_mode<synchronous>, transform_indices = @transform_13, window_bounds = array<i64: 1, 256>}, {transform_indices = @transform_14, window_bounds = array<i64: 256, 128>}, {transform_indices = @transform_15, window_bounds = array<i64: 1, 128>}, {transform_indices = @transform_16, window_bounds = array<i64: 16, 128>}]} {
    %c0_i32 = arith.constant 0 : i32
    %0 = arith.cmpi eq, %arg0, %c0_i32 : i32
    %1 = arith.extui %0 : i1 to i32
    %c0_i32_0 = arith.constant 0 : i32
    %2 = arith.cmpi ne, %1, %c0_i32_0 : i32
    scf.if %2 {
      %c0_9 = arith.constant 0 : index
      %c0_10 = arith.constant 0 : index
      %15 = vector.load %arg1[%c0_9, %c0_10] : memref<16x10xf32, #tpu.memory_space<vmem>>, vector<16x10xf32>
      %16 = arith.truncf %15 : vector<16x10xf32> to vector<16x10xbf16>
      %c0_11 = arith.constant 0 : index
      %c0_12 = arith.constant 0 : index
      %17 = vector.load %arg3[%c0_11, %c0_12] : memref<10x32xbf16, #tpu.memory_space<vmem>>, vector<10x32xbf16>
      %cst_13 = arith.constant dense<0.000000e+00> : vector<16x32xf32>
      %18 = tpu.matmul %16, %17, %cst_13 {dimension_numbers = #tpu.dot_dimension_numbers<[1], [0], [0], [1], [0, 0, 1, 1], [], []>} : vector<16x10xbf16>, vector<10x32xbf16>, vector<16x32xf32> -> vector<16x32xf32>
      %cst_14 = arith.constant dense<0.000000e+00> : vector<32xf32>
      %19 = vector.multi_reduction <add>, %18, %cst_14 [0] : vector<16x32xf32> to vector<32xf32>
      %20 = vector.shape_cast %19 : vector<32xf32> to vector<1x32xf32>
      %21 = arith.mulf %18, %18 : vector<16x32xf32>
      %cst_15 = arith.constant dense<0.000000e+00> : vector<32xf32>
      %22 = vector.multi_reduction <add>, %21, %cst_15 [0] : vector<16x32xf32> to vector<32xf32>
      %23 = vector.shape_cast %22 : vector<32xf32> to vector<1x32xf32>
      %cst_16 = arith.constant 1.250000e-01 : f32
      %24 = vector.broadcast %cst_16 : f32 to vector<1x32xf32>
      %25 = arith.mulf %20, %24 : vector<1x32xf32>
      %cst_17 = arith.constant 1.250000e-01 : f32
      %26 = vector.broadcast %cst_17 : f32 to vector<1x32xf32>
      %27 = arith.mulf %23, %26 : vector<1x32xf32>
      %28 = arith.mulf %25, %25 : vector<1x32xf32>
      %29 = arith.subf %27, %28 : vector<1x32xf32>
      %c0_18 = arith.constant 0 : index
      %c0_19 = arith.constant 0 : index
      %30 = vector.load %arg4[%c0_18, %c0_19] : memref<1x32xf32, #tpu.memory_space<vmem>>, vector<1x32xf32>
      %cst_20 = arith.constant 9.99999974E-6 : f32
      %31 = vector.broadcast %cst_20 : f32 to vector<1x32xf32>
      %32 = arith.addf %29, %31 : vector<1x32xf32>
      %33 = math.rsqrt %32 : vector<1x32xf32>
      %34 = arith.mulf %30, %33 : vector<1x32xf32>
      %c0_21 = arith.constant 0 : index
      %c0_22 = arith.constant 0 : index
      %35 = vector.load %arg5[%c0_21, %c0_22] : memref<1x32xf32, #tpu.memory_space<vmem>>, vector<1x32xf32>
      %36 = arith.mulf %25, %34 : vector<1x32xf32>
      %37 = arith.subf %35, %36 : vector<1x32xf32>
      %38 = vector.broadcast %34 : vector<1x32xf32> to vector<16x32xf32>
      %39 = arith.mulf %18, %38 : vector<16x32xf32>
      %40 = vector.broadcast %37 : vector<1x32xf32> to vector<16x32xf32>
      %41 = arith.addf %39, %40 : vector<16x32xf32>
      %cst_23 = arith.constant 0.000000e+00 : f32
      %42 = vector.broadcast %cst_23 : f32 to vector<16x32xf32>
      %43 = arith.maximumf %41, %42 : vector<16x32xf32>
      %c0_24 = arith.constant 0 : index
      %c0_25 = arith.constant 0 : index
      %44 = vector.load %arg2[%c0_24, %c0_25] : memref<16x1xf32, #tpu.memory_space<vmem>>, vector<16x1xf32>
      %45 = vector.broadcast %44 : vector<16x1xf32> to vector<16x32xf32>
      %46 = arith.mulf %43, %45 : vector<16x32xf32>
      %47 = arith.truncf %46 : vector<16x32xf32> to vector<16x32xbf16>
      %c0_26 = arith.constant 0 : index
      %c0_27 = arith.constant 0 : index
      %48 = vector.load %arg6[%c0_26, %c0_27] : memref<32x64xbf16, #tpu.memory_space<vmem>>, vector<32x64xbf16>
      %cst_28 = arith.constant dense<0.000000e+00> : vector<16x64xf32>
      %49 = tpu.matmul %47, %48, %cst_28 {dimension_numbers = #tpu.dot_dimension_numbers<[1], [0], [0], [1], [0, 0, 1, 1], [], []>} : vector<16x32xbf16>, vector<32x64xbf16>, vector<16x64xf32> -> vector<16x64xf32>
      %cst_29 = arith.constant dense<0.000000e+00> : vector<64xf32>
      %50 = vector.multi_reduction <add>, %49, %cst_29 [0] : vector<16x64xf32> to vector<64xf32>
      %51 = vector.shape_cast %50 : vector<64xf32> to vector<1x64xf32>
      %52 = arith.mulf %49, %49 : vector<16x64xf32>
      %cst_30 = arith.constant dense<0.000000e+00> : vector<64xf32>
      %53 = vector.multi_reduction <add>, %52, %cst_30 [0] : vector<16x64xf32> to vector<64xf32>
      %54 = vector.shape_cast %53 : vector<64xf32> to vector<1x64xf32>
      %cst_31 = arith.constant 1.250000e-01 : f32
      %55 = vector.broadcast %cst_31 : f32 to vector<1x64xf32>
      %56 = arith.mulf %51, %55 : vector<1x64xf32>
      %cst_32 = arith.constant 1.250000e-01 : f32
      %57 = vector.broadcast %cst_32 : f32 to vector<1x64xf32>
      %58 = arith.mulf %54, %57 : vector<1x64xf32>
      %59 = arith.mulf %56, %56 : vector<1x64xf32>
      %60 = arith.subf %58, %59 : vector<1x64xf32>
      %c0_33 = arith.constant 0 : index
      %c0_34 = arith.constant 0 : index
      %61 = vector.load %arg7[%c0_33, %c0_34] : memref<1x64xf32, #tpu.memory_space<vmem>>, vector<1x64xf32>
      %cst_35 = arith.constant 9.99999974E-6 : f32
      %62 = vector.broadcast %cst_35 : f32 to vector<1x64xf32>
      %63 = arith.addf %60, %62 : vector<1x64xf32>
      %64 = math.rsqrt %63 : vector<1x64xf32>
      %65 = arith.mulf %61, %64 : vector<1x64xf32>
      %c0_36 = arith.constant 0 : index
      %c0_37 = arith.constant 0 : index
      %66 = vector.load %arg8[%c0_36, %c0_37] : memref<1x64xf32, #tpu.memory_space<vmem>>, vector<1x64xf32>
      %67 = arith.mulf %56, %65 : vector<1x64xf32>
      %68 = arith.subf %66, %67 : vector<1x64xf32>
      %69 = vector.broadcast %65 : vector<1x64xf32> to vector<16x64xf32>
      %70 = arith.mulf %49, %69 : vector<16x64xf32>
      %71 = vector.broadcast %68 : vector<1x64xf32> to vector<16x64xf32>
      %72 = arith.addf %70, %71 : vector<16x64xf32>
      %cst_38 = arith.constant 0.000000e+00 : f32
      %73 = vector.broadcast %cst_38 : f32 to vector<16x64xf32>
      %74 = arith.maximumf %72, %73 : vector<16x64xf32>
      %c0_39 = arith.constant 0 : index
      %c0_40 = arith.constant 0 : index
      %75 = vector.load %arg2[%c0_39, %c0_40] : memref<16x1xf32, #tpu.memory_space<vmem>>, vector<16x1xf32>
      %76 = vector.broadcast %75 : vector<16x1xf32> to vector<16x64xf32>
      %77 = arith.mulf %74, %76 : vector<16x64xf32>
      %78 = arith.truncf %77 : vector<16x64xf32> to vector<16x64xbf16>
      %c0_41 = arith.constant 0 : index
      %c0_42 = arith.constant 0 : index
      %79 = vector.load %arg9[%c0_41, %c0_42] : memref<64x128xbf16, #tpu.memory_space<vmem>>, vector<64x128xbf16>
      %cst_43 = arith.constant dense<0.000000e+00> : vector<16x128xf32>
      %80 = tpu.matmul %78, %79, %cst_43 {dimension_numbers = #tpu.dot_dimension_numbers<[1], [0], [0], [1], [0, 0, 1, 1], [], []>} : vector<16x64xbf16>, vector<64x128xbf16>, vector<16x128xf32> -> vector<16x128xf32>
      %cst_44 = arith.constant dense<0.000000e+00> : vector<128xf32>
      %81 = vector.multi_reduction <add>, %80, %cst_44 [0] : vector<16x128xf32> to vector<128xf32>
      %82 = vector.shape_cast %81 : vector<128xf32> to vector<1x128xf32>
      %83 = arith.mulf %80, %80 : vector<16x128xf32>
      %cst_45 = arith.constant dense<0.000000e+00> : vector<128xf32>
      %84 = vector.multi_reduction <add>, %83, %cst_45 [0] : vector<16x128xf32> to vector<128xf32>
      %85 = vector.shape_cast %84 : vector<128xf32> to vector<1x128xf32>
      %cst_46 = arith.constant 1.250000e-01 : f32
      %86 = vector.broadcast %cst_46 : f32 to vector<1x128xf32>
      %87 = arith.mulf %82, %86 : vector<1x128xf32>
      %cst_47 = arith.constant 1.250000e-01 : f32
      %88 = vector.broadcast %cst_47 : f32 to vector<1x128xf32>
      %89 = arith.mulf %85, %88 : vector<1x128xf32>
      %90 = arith.mulf %87, %87 : vector<1x128xf32>
      %91 = arith.subf %89, %90 : vector<1x128xf32>
      %c0_48 = arith.constant 0 : index
      %c0_49 = arith.constant 0 : index
      %92 = vector.load %arg10[%c0_48, %c0_49] : memref<1x128xf32, #tpu.memory_space<vmem>>, vector<1x128xf32>
      %cst_50 = arith.constant 9.99999974E-6 : f32
      %93 = vector.broadcast %cst_50 : f32 to vector<1x128xf32>
      %94 = arith.addf %91, %93 : vector<1x128xf32>
      %95 = math.rsqrt %94 : vector<1x128xf32>
      %96 = arith.mulf %92, %95 : vector<1x128xf32>
      %c0_51 = arith.constant 0 : index
      %c0_52 = arith.constant 0 : index
      %97 = vector.load %arg11[%c0_51, %c0_52] : memref<1x128xf32, #tpu.memory_space<vmem>>, vector<1x128xf32>
      %98 = arith.mulf %87, %96 : vector<1x128xf32>
      %99 = arith.subf %97, %98 : vector<1x128xf32>
      %100 = vector.broadcast %96 : vector<1x128xf32> to vector<16x128xf32>
      %101 = arith.mulf %80, %100 : vector<16x128xf32>
      %102 = vector.broadcast %99 : vector<1x128xf32> to vector<16x128xf32>
      %103 = arith.addf %101, %102 : vector<16x128xf32>
      %cst_53 = arith.constant 0.000000e+00 : f32
      %104 = vector.broadcast %cst_53 : f32 to vector<16x128xf32>
      %105 = arith.maximumf %103, %104 : vector<16x128xf32>
      %c0_54 = arith.constant 0 : index
      %c0_55 = arith.constant 0 : index
      %106 = vector.load %arg2[%c0_54, %c0_55] : memref<16x1xf32, #tpu.memory_space<vmem>>, vector<16x1xf32>
      %107 = vector.broadcast %106 : vector<16x1xf32> to vector<16x128xf32>
      %108 = arith.mulf %105, %107 : vector<16x128xf32>
      %109 = arith.truncf %108 : vector<16x128xf32> to vector<16x128xbf16>
      %c0_56 = arith.constant 0 : index
      %c0_57 = arith.constant 0 : index
      %110 = vector.load %arg12[%c0_56, %c0_57] : memref<128x256xbf16, #tpu.memory_space<vmem>>, vector<128x256xbf16>
      %cst_58 = arith.constant dense<0.000000e+00> : vector<16x256xf32>
      %111 = tpu.matmul %109, %110, %cst_58 {dimension_numbers = #tpu.dot_dimension_numbers<[1], [0], [0], [1], [0, 0, 1, 1], [], []>} : vector<16x128xbf16>, vector<128x256xbf16>, vector<16x256xf32> -> vector<16x256xf32>
      %cst_59 = arith.constant dense<0.000000e+00> : vector<256xf32>
      %112 = vector.multi_reduction <add>, %111, %cst_59 [0] : vector<16x256xf32> to vector<256xf32>
      %113 = vector.shape_cast %112 : vector<256xf32> to vector<1x256xf32>
      %114 = arith.mulf %111, %111 : vector<16x256xf32>
      %cst_60 = arith.constant dense<0.000000e+00> : vector<256xf32>
      %115 = vector.multi_reduction <add>, %114, %cst_60 [0] : vector<16x256xf32> to vector<256xf32>
      %116 = vector.shape_cast %115 : vector<256xf32> to vector<1x256xf32>
      %cst_61 = arith.constant 1.250000e-01 : f32
      %117 = vector.broadcast %cst_61 : f32 to vector<1x256xf32>
      %118 = arith.mulf %113, %117 : vector<1x256xf32>
      %cst_62 = arith.constant 1.250000e-01 : f32
      %119 = vector.broadcast %cst_62 : f32 to vector<1x256xf32>
      %120 = arith.mulf %116, %119 : vector<1x256xf32>
      %121 = arith.mulf %118, %118 : vector<1x256xf32>
      %122 = arith.subf %120, %121 : vector<1x256xf32>
      %c0_63 = arith.constant 0 : index
      %c0_64 = arith.constant 0 : index
      %123 = vector.load %arg13[%c0_63, %c0_64] : memref<1x256xf32, #tpu.memory_space<vmem>>, vector<1x256xf32>
      %cst_65 = arith.constant 9.99999974E-6 : f32
      %124 = vector.broadcast %cst_65 : f32 to vector<1x256xf32>
      %125 = arith.addf %122, %124 : vector<1x256xf32>
      %126 = math.rsqrt %125 : vector<1x256xf32>
      %127 = arith.mulf %123, %126 : vector<1x256xf32>
      %c0_66 = arith.constant 0 : index
      %c0_67 = arith.constant 0 : index
      %128 = vector.load %arg14[%c0_66, %c0_67] : memref<1x256xf32, #tpu.memory_space<vmem>>, vector<1x256xf32>
      %129 = arith.mulf %118, %127 : vector<1x256xf32>
      %130 = arith.subf %128, %129 : vector<1x256xf32>
      %131 = vector.broadcast %127 : vector<1x256xf32> to vector<16x256xf32>
      %132 = arith.mulf %111, %131 : vector<16x256xf32>
      %133 = vector.broadcast %130 : vector<1x256xf32> to vector<16x256xf32>
      %134 = arith.addf %132, %133 : vector<16x256xf32>
      %cst_68 = arith.constant 0.000000e+00 : f32
      %135 = vector.broadcast %cst_68 : f32 to vector<16x256xf32>
      %136 = arith.maximumf %134, %135 : vector<16x256xf32>
      %c0_69 = arith.constant 0 : index
      %c0_70 = arith.constant 0 : index
      %137 = vector.load %arg2[%c0_69, %c0_70] : memref<16x1xf32, #tpu.memory_space<vmem>>, vector<16x1xf32>
      %138 = vector.broadcast %137 : vector<16x1xf32> to vector<16x256xf32>
      %139 = arith.mulf %136, %138 : vector<16x256xf32>
      %140 = arith.truncf %139 : vector<16x256xf32> to vector<16x256xbf16>
      %c0_71 = arith.constant 0 : index
      %c0_72 = arith.constant 0 : index
      %141 = vector.load %arg18[%c0_71, %c0_72] : memref<16x256xbf16, #tpu.memory_space<vmem>>, vector<16x256xbf16>
      tpu.vector_store %arg18[%c0_71, %c0_72], %140 {strides = array<i32>} : memref<16x256xbf16, #tpu.memory_space<vmem>>, vector<16x256xbf16>,
    } else {
    }
    %c0 = arith.constant 0 : index
    %c0_1 = arith.constant 0 : index
    %3 = vector.load %arg18[%c0, %c0_1] : memref<16x256xbf16, #tpu.memory_space<vmem>>, vector<16x256xbf16>
    %c0_2 = arith.constant 0 : index
    %c0_3 = arith.constant 0 : index
    %4 = vector.load %arg15[%c0_2, %c0_3] : memref<256x128xbf16, #tpu.memory_space<vmem>>, vector<256x128xbf16>
    %cst = arith.constant dense<0.000000e+00> : vector<16x128xf32>
    %5 = tpu.matmul %3, %4, %cst {dimension_numbers = #tpu.dot_dimension_numbers<[1], [0], [0], [1], [0, 0, 1, 1], [], []>} : vector<16x256xbf16>, vector<256x128xbf16>, vector<16x128xf32> -> vector<16x128xf32>
    %c0_4 = arith.constant 0 : index
    %c0_5 = arith.constant 0 : index
    %6 = vector.load %arg16[%c0_4, %c0_5] : memref<1x128xf32, #tpu.memory_space<vmem>>, vector<1x128xf32>
    %7 = vector.broadcast %6 : vector<1x128xf32> to vector<16x128xf32>
    %8 = arith.addf %5, %7 : vector<16x128xf32>
    %9 = arith.negf %8 : vector<16x128xf32>
    %10 = math.exp %9 : vector<16x128xf32>
    %cst_6 = arith.constant 1.000000e+00 : f32
    %11 = vector.broadcast %cst_6 : f32 to vector<16x128xf32>
    %12 = arith.addf %11, %10 : vector<16x128xf32>
    %13 = arith.divf %11, %12 : vector<16x128xf32>
    %c0_7 = arith.constant 0 : index
    %c0_8 = arith.constant 0 : index
    %14 = vector.load %arg17[%c0_7, %c0_8] : memref<16x128xf32, #tpu.memory_space<vmem>>, vector<16x128xf32>
    tpu.vector_store %arg17[%c0_7, %c0_8], %13 {strides = array<i32>} : memref<16x128xf32, #tpu.memory_space<vmem>>, vector<16x128xf32>,
    return
  }
  func.func @transform_0(%arg0: i32) -> (i32, i32) {
    %c0_i32 = arith.constant 0 : i32
    %c0_i32_0 = arith.constant 0 : i32
    %c0_i32_1 = arith.constant 0 : i32
    return %c0_i32, %c0_i32_0 : i32, i32
  }
  func.func @transform_1(%arg0: i32) -> (i32, i32) {
    %c0_i32 = arith.constant 0 : i32
    %c0_i32_0 = arith.constant 0 : i32
    %c0_i32_1 = arith.constant 0 : i32
    return %c0_i32, %c0_i32_0 : i32, i32
  }
  func.func @transform_2(%arg0: i32) -> (i32, i32) {
    %c0_i32 = arith.constant 0 : i32
    %c0_i32_0 = arith.constant 0 : i32
    %c0_i32_1 = arith.constant 0 : i32
    return %c0_i32, %c0_i32_0 : i32, i32
  }
  func.func @transform_3(%arg0: i32) -> (i32, i32) {
    %c0_i32 = arith.constant 0 : i32
    %c0_i32_0 = arith.constant 0 : i32
    %c0_i32_1 = arith.constant 0 : i32
    return %c0_i32, %c0_i32_0 : i32, i32
  }
  func.func @transform_4(%arg0: i32) -> (i32, i32) {
    %c0_i32 = arith.constant 0 : i32
    %c0_i32_0 = arith.constant 0 : i32
    %c0_i32_1 = arith.constant 0 : i32
    return %c0_i32, %c0_i32_0 : i32, i32
  }
  func.func @transform_5(%arg0: i32) -> (i32, i32) {
    %c0_i32 = arith.constant 0 : i32
    %c0_i32_0 = arith.constant 0 : i32
    %c0_i32_1 = arith.constant 0 : i32
    return %c0_i32, %c0_i32_0 : i32, i32
  }
  func.func @transform_6(%arg0: i32) -> (i32, i32) {
    %c0_i32 = arith.constant 0 : i32
    %c0_i32_0 = arith.constant 0 : i32
    %c0_i32_1 = arith.constant 0 : i32
    return %c0_i32, %c0_i32_0 : i32, i32
  }
  func.func @transform_7(%arg0: i32) -> (i32, i32) {
    %c0_i32 = arith.constant 0 : i32
    %c0_i32_0 = arith.constant 0 : i32
    %c0_i32_1 = arith.constant 0 : i32
    return %c0_i32, %c0_i32_0 : i32, i32
  }
  func.func @transform_8(%arg0: i32) -> (i32, i32) {
    %c0_i32 = arith.constant 0 : i32
    %c0_i32_0 = arith.constant 0 : i32
    %c0_i32_1 = arith.constant 0 : i32
    return %c0_i32, %c0_i32_0 : i32, i32
  }
  func.func @transform_9(%arg0: i32) -> (i32, i32) {
    %c0_i32 = arith.constant 0 : i32
    %c0_i32_0 = arith.constant 0 : i32
    %c0_i32_1 = arith.constant 0 : i32
    return %c0_i32, %c0_i32_0 : i32, i32
  }
  func.func @transform_10(%arg0: i32) -> (i32, i32) {
    %c0_i32 = arith.constant 0 : i32
    %c0_i32_0 = arith.constant 0 : i32
    %c0_i32_1 = arith.constant 0 : i32
    return %c0_i32, %c0_i32_0 : i32, i32
  }
  func.func @transform_11(%arg0: i32) -> (i32, i32) {
    %c0_i32 = arith.constant 0 : i32
    %c0_i32_0 = arith.constant 0 : i32
    %c0_i32_1 = arith.constant 0 : i32
    return %c0_i32, %c0_i32_0 : i32, i32
  }
  func.func @transform_12(%arg0: i32) -> (i32, i32) {
    %c0_i32 = arith.constant 0 : i32
    %c0_i32_0 = arith.constant 0 : i32
    %c0_i32_1 = arith.constant 0 : i32
    return %c0_i32, %c0_i32_0 : i32, i32
  }
  func.func @transform_13(%arg0: i32) -> (i32, i32) {
    %c0_i32 = arith.constant 0 : i32
    %c0_i32_0 = arith.constant 0 : i32
    %c0_i32_1 = arith.constant 0 : i32
    return %c0_i32, %c0_i32_0 : i32, i32
  }
  func.func @transform_14(%arg0: i32) -> (i32, i32) {
    %c0_i32 = arith.constant 0 : i32
    %c0_i32_0 = arith.constant 0 : i32
    return %c0_i32, %arg0 : i32, i32
  }
  func.func @transform_15(%arg0: i32) -> (i32, i32) {
    %c0_i32 = arith.constant 0 : i32
    %c0_i32_0 = arith.constant 0 : i32
    return %c0_i32, %arg0 : i32, i32
  }
  func.func @transform_16(%arg0: i32) -> (i32, i32) {
    %c0_i32 = arith.constant 0 : i32
    %c0_i32_0 = arith.constant 0 : i32
    return %c0_i32, %arg0 : i32, i32
  }
}

</mosaic_0001>

<llo_original>
// kernel: generator_forward.1
$region0: #{generator_forward.1}
  #allocation0 [shape = 'u32[]', space=smem, size = 0x4, offset = 0x4, fixed_abs, tag = 'smem constant byte address 0x4 - core index']
  #allocation1 [shape = 'u32[144,128]{1,0:T(1,128)}', space=vmem, size = 0x12000, scoped, tag = 'internal scratch']
  #allocation2 [shape = 'bf16[16,256]{1,0:T(16,128)(2,1)}', space=vmem, size = 0x2000, scoped, tag = 'scratch operand']
  %s0 = inlined_call_operand.vmem [shape: f32[16,10], index: 0, kind: input, shape index: {}]
  %s1 = inlined_call_operand.vmem [shape: f32[16,1], index: 1, kind: input, shape index: {}]
  %s2 = inlined_call_operand.vmem [shape: bf16[10,32], index: 2, kind: input, shape index: {}]
  %s3 = inlined_call_operand.vmem [shape: f32[1,32], index: 3, kind: input, shape index: {}]
  %s4 = inlined_call_operand.vmem [shape: f32[1,32], index: 4, kind: input, shape index: {}]
  %s5 = inlined_call_operand.vmem [shape: bf16[32,64], index: 5, kind: input, shape index: {}]
  %s6 = inlined_call_operand.vmem [shape: f32[1,64], index: 6, kind: input, shape index: {}]
  %s7 = inlined_call_operand.vmem [shape: f32[1,64], index: 7, kind: input, shape index: {}]
  %s8 = inlined_call_operand.vmem [shape: bf16[64,128], index: 8, kind: input, shape index: {}]
  %s9 = inlined_call_operand.vmem [shape: f32[1,128], index: 9, kind: input, shape index: {}]
  %s10 = inlined_call_operand.vmem [shape: f32[1,128], index: 10, kind: input, shape index: {}]
  %s11 = inlined_call_operand.vmem [shape: bf16[128,256], index: 11, kind: input, shape index: {}]
  %s12 = inlined_call_operand.vmem [shape: f32[1,256], index: 12, kind: input, shape index: {}]
  %s13 = inlined_call_operand.vmem [shape: f32[1,256], index: 13, kind: input, shape index: {}]
  %s14 = inlined_call_operand.vmem [shape: bf16[256,128], index: 14, kind: input, shape index: {}]
  %s15 = inlined_call_operand.vmem [shape: f32[1,128], index: 15, kind: input, shape index: {}]
  %s16 = inlined_call_operand.vmem [shape: f32[16,128], index: 16, kind: output, shape index: {}]
  %s17 = sld [smem:[#allocation0]]
  $region78: #{generator_forward.1} parent=0
    _
  %s19 = ssub.s32 1, %s17
  %s20 = scalar_select 0, %s19, %s17
  // Predicated region
  $region2: #{generator_forward.1} parent=0 // pred_check
    _
  $region3: #{generator_forward.1} parent=0 // pred_check_branch
    %22 = sbr.rel (0) target = $region5
  $region4: #{generator_forward.1} parent=0 // pred_region
    _
  $region5: #{generator_forward.1} parent=0 // pred_fallthru
    _
  // Predicated region
  $region6: #{generator_forward.1} parent=0 // pred_check
    _
  $region7: #{generator_forward.1} parent=0 // pred_check_branch
    %24 = sbr.rel (0) target = $region9
  $region8: #{generator_forward.1} parent=0 // pred_region
    _
  $region9: #{generator_forward.1} parent=0 // pred_fallthru
    _
  // Predicated region
  $region10: #{generator_forward.1} parent=0 // pred_check
    _
  $region11: #{generator_forward.1} parent=0 // pred_check_branch
    %26 = sbr.rel (0) target = $region13
  $region12: #{generator_forward.1} parent=0 // pred_region
    _
  $region13: #{generator_forward.1} parent=0 // pred_fallthru
    _
  // Predicated region
  $region14: #{generator_forward.1} parent=0 // pred_check
    _
  $region15: #{generator_forward.1} parent=0 // pred_check_branch
    %28 = sbr.rel (0) target = $region17
  $region16: #{generator_forward.1} parent=0 // pred_region
    _
  $region17: #{generator_forward.1} parent=0 // pred_fallthru
    _
  // Predicated region
  $region18: #{generator_forward.1} parent=0 // pred_check
    _
  $region19: #{generator_forward.1} parent=0 // pred_check_branch
    %30 = sbr.rel (0) target = $region21
  $region20: #{generator_forward.1} parent=0 // pred_region
    _
  $region21: #{generator_forward.1} parent=0 // pred_fallthru
    _
  // Predicated region
  $region22: #{generator_forward.1} parent=0 // pred_check
    _
  $region23: #{generator_forward.1} parent=0 // pred_check_branch
    %32 = sbr.rel (0) target = $region25
  $region24: #{generator_forward.1} parent=0 // pred_region
    _
  $region25: #{generator_forward.1} parent=0 // pred_fallthru
    _
  // Predicated region
  $region26: #{generator_forward.1} parent=0 // pred_check
    _
  $region27: #{generator_forward.1} parent=0 // pred_check_branch
    %34 = sbr.rel (0) target = $region29
  $region28: #{generator_forward.1} parent=0 // pred_region
    _
  $region29: #{generator_forward.1} parent=0 // pred_fallthru
    _
  // Predicated region
  $region30: #{generator_forward.1} parent=0 // pred_check
    _
  $region31: #{generator_forward.1} parent=0 // pred_check_branch
    %36 = sbr.rel (0) target = $region33
  $region32: #{generator_forward.1} parent=0 // pred_region
    _
  $region33: #{generator_forward.1} parent=0 // pred_fallthru
    _
  // Predicated region
  $region34: #{generator_forward.1} parent=0 // pred_check
    _
  $region35: #{generator_forward.1} parent=0 // pred_check_branch
    %38 = sbr.rel (0) target = $region37
  $region36: #{generator_forward.1} parent=0 // pred_region
    _
  $region37: #{generator_forward.1} parent=0 // pred_fallthru
    _
  // Predicated region
  $region38: #{generator_forward.1} parent=0 // pred_check
    _
  $region39: #{generator_forward.1} parent=0 // pred_check_branch
    %40 = sbr.rel (0) target = $region41
  $region40: #{generator_forward.1} parent=0 // pred_region
    _
  $region41: #{generator_forward.1} parent=0 // pred_fallthru
    _
  // Predicated region
  $region42: #{generator_forward.1} parent=0 // pred_check
    _
  $region43: #{generator_forward.1} parent=0 // pred_check_branch
    %42 = sbr.rel (0) target = $region45
  $region44: #{generator_forward.1} parent=0 // pred_region
    _
  $region45: #{generator_forward.1} parent=0 // pred_fallthru
    _
  // Predicated region
  $region46: #{generator_forward.1} parent=0 // pred_check
    _
  $region47: #{generator_forward.1} parent=0 // pred_check_branch
    %44 = sbr.rel (0) target = $region49
  $region48: #{generator_forward.1} parent=0 // pred_region
    _
  $region49: #{generator_forward.1} parent=0 // pred_fallthru
    _
  // Predicated region
  $region50: #{generator_forward.1} parent=0 // pred_check
    _
  $region51: #{generator_forward.1} parent=0 // pred_check_branch
    %46 = sbr.rel (0) target = $region53
  $region52: #{generator_forward.1} parent=0 // pred_region
    _
  $region53: #{generator_forward.1} parent=0 // pred_fallthru
    _
  // Predicated region
  $region54: #{generator_forward.1} parent=0 // pred_check
    _
  $region55: #{generator_forward.1} parent=0 // pred_check_branch
    %48 = sbr.rel (0) target = $region57
  $region56: #{generator_forward.1} parent=0 // pred_region
    _
  $region57: #{generator_forward.1} parent=0 // pred_fallthru
    _
  // Predicated region
  $region58: #{generator_forward.1} parent=0 // pred_check
    _
  $region59: #{generator_forward.1} parent=0 // pred_check_branch
    %50 = sbr.rel (0) target = $region61
  $region60: #{generator_forward.1} parent=0 // pred_region
    _
  $region61: #{generator_forward.1} parent=0 // pred_fallthru
    _
  // Predicated region
  $region62: #{generator_forward.1} parent=0 // pred_check
    _
  $region63: #{generator_forward.1} parent=0 // pred_check_branch
    %52 = sbr.rel (0) target = $region65
  $region64: #{generator_forward.1} parent=0 // pred_region
    _
  $region65: #{generator_forward.1} parent=0 // pred_fallthru
    _
  %p54 = scmp.eq.s32.totalorder 0, 0
  // Predicated region
  $region66: #{generator_forward.1} parent=0 // pred_check
    %p55 = pneg %p54
  $region67: #{generator_forward.1} parent=0 // pred_check_branch
    %57 = sbr.rel (%p55) target = $region69
  $region68: #{generator_forward.1} parent=0 // pred_region
    %v58 = vld [vmem:[%s0] sm:$0xff]
    %v59 = vld [vmem:[%s0 + $0x8] sm:$0xff]
    %v60 = vpack.c.bf16 %v59, %v58
    %v61 = vld [vmem:[%s2] sm:$0xf]
    %v62 = vld [vmem:[%s2 + $0x4] sm:$0x1]
    %v65 = vunpack.c.l.b16 %v61
    %v66 = vunpack.c.l.b16 %v62
    %v67 = vpack.c.b16 %v66, %v65
    %vm68 = vcmask 80896
    %v70 = vsel %vm68, %v60, 0
    %vm72 = vcmask 1044480
    %v74 = vsel %vm72, %v67, 0
    %76 = vmatprep.subr.bf16.mxu0 0
    %77 = vmatpush1.bf16.msra.mxu0 %v74
    %78 = vmatprep.subr.bf16.mxu0 0
    %79 = vmatpush1.bf16.msra.mxu0 0
    %80 = vmatprep.subr.bf16.mxu0 0
    %81 = vmatpush1.bf16.msra.mxu0 0
    %82 = vmatprep.subr.bf16.mxu0 0
    %83 = vmatpush1.bf16.msra.mxu0 0
    %84 = vmatprep.subr.bf16.mxu0 0
    %85 = vmatpush1.bf16.msra.mxu0 0
    %86 = vmatprep.subr.bf16.mxu0 0
    %87 = vmatpush1.bf16.msra.mxu0 0
    %88 = vmatprep.subr.bf16.mxu0 0
    %89 = vmatpush1.bf16.msra.mxu0 0
    %90 = vmatprep.subr.bf16.mxu0 0
    %91 = vmatpush1.bf16.msra.mxu0 0
    %92 = vmatprep.subr.bf16.mxu0 0
    %93 = vmatpush1.bf16.msra.mxu0 0
    %94 = vmatprep.subr.bf16.mxu0 0
    %95 = vmatpush1.bf16.msra.mxu0 0
    %96 = vmatprep.subr.bf16.mxu0 0
    %97 = vmatpush1.bf16.msra.mxu0 0
    %98 = vmatprep.subr.bf16.mxu0 0
    %99 = vmatpush1.bf16.msra.mxu0 0
    %100 = vmatprep.subr.bf16.mxu0 0
    %101 = vmatpush1.bf16.msra.mxu0 0
    %102 = vmatprep.subr.bf16.mxu0 0
    %103 = vmatpush1.bf16.msra.mxu0 0
    %104 = vmatprep.subr.bf16.mxu0 0
    %105 = vmatpush1.bf16.msra.mxu0 0
    %106 = vmatprep.subr.bf16.mxu0 0
    %107 = vmatpush1.bf16.msra.mxu0 0
    %108 = vmatprep.mubr.bf16.mxu0 0
    %109 = vmatmul.mubr.bf16.gmra.mrb[0].mxu0 %v70
    %v110 = vpop.f32.mrb[0].mxu0
    %v111 = vadd.f32 0.0, %v110
    %v112 = vpop.f32.mrb[0].mxu0
    %v113 = vpop.f32.mrb[0].mxu0
    %v114 = vadd.f32 0.0, %v113
    %v115 = vpop.f32.mrb[0].mxu0
    %116 = vdwg.mxu0
    %vm117 = vcmask 261120
    %v118 = vsel %vm117, %v111, 0.0
    %v119 = vsel %vm117, %v114, 0.0
    %v120 = vadd.f32 %v118, %v119
    %v121 = vrot.slane %v120, 4
    %v122 = vadd.f32 %v120, %v121
    %v123 = vrot.slane %v122, 2
    %v124 = vadd.f32 %v122, %v123
    %v125 = vrot.slane %v124, 1
    %v126 = vadd.f32 %v124, %v125
    %v127 = vmul.f32 %v111, %v111
    %v128 = vmul.f32 %v114, %v114
    %v129 = vsel %vm117, %v127, 0.0
    %v130 = vsel %vm117, %v128, 0.0
    %v131 = vadd.f32 %v129, %v130
    %v132 = vrot.slane %v131, 4
    %v133 = vadd.f32 %v131, %v132
    %v134 = vrot.slane %v133, 2
    %v135 = vadd.f32 %v133, %v134
    %v136 = vrot.slane %v135, 1
    %v137 = vadd.f32 %v135, %v136
    %v138 = vmul.f32 %v126, 0.125
    %v139 = vmul.f32 %v137, 0.125
    %v140 = vmul.f32 %v138, %v138
    %v141 = vsub.f32 %v139, %v140
    %v142 = vld [vmem:[%s3] sm:$0x1]
    %v143 = vadd.f32 %v141, 1e-05
    %v144 = vrsqrt.pop %v143
    %v145 = vmul.f32 %v142, %v144
    %v146 = vld [vmem:[%s4] sm:$0x1]
    %v147 = vmul.f32 %v138, %v145
    %v148 = vsub.f32 %v146, %v147
    %v150 = vlaneseq
    %v151 = vshrl.u32 %v150, 7
    %v152 = vsub.s32 0, %v151
    %v153 = vrot.slane %v145, %v152
    %v155 = vmul.f32 %v111, %v153
    %v156 = vmul.f32 %v114, %v153
    %v158 = vlaneseq
    %v159 = vshrl.u32 %v158, 7
    %v160 = vsub.s32 0, %v159
    %v161 = vrot.slane %v148, %v160
    %v163 = vadd.f32 %v155, %v161
    %v164 = vadd.f32 %v156, %v161
    %v165 = vmax.f32 %v163, 0.0
    %v166 = vmax.f32 %v164, 0.0
    %v167 = vld [vmem:[%s1] sm:$0xff]
    %v168 = vld [vmem:[%s1 + $0x8] sm:$0xff]
    %170 = vset.pattern.permute.xlu0 0
    %171 = vperm.xlu0 %170, %v167
    %v172 = vpop.permute.xlu0 %171
    %175 = vset.pattern.permute.xlu0 0
    %176 = vperm.xlu0 %175, %v168
    %v177 = vpop.permute.xlu0 %176
    %v179 = vmul.f32 %v165, %v172
    %v180 = vmul.f32 %v166, %v177
    %v181 = vpack.c.bf16 %v180, %v179
    %v182 = vld [vmem:[%s5] sm:$0xf]
    %v183 = vld [vmem:[%s5 + $0x4] sm:$0xf]
    %v184 = vld [vmem:[%s5 + $0x8] sm:$0xf]
    %v185 = vld [vmem:[%s5 + $0xc] sm:$0xf]
    %v190 = vunpack.c.l.b16 %v182
    %v191 = vunpack.c.l.b16 %v183
    %v192 = vunpack.c.l.b16 %v184
    %v193 = vunpack.c.l.b16 %v185
    %v194 = vpack.c.b16 %v191, %v190
    %v195 = vpack.c.b16 %v193, %v192
    %v199 = vsel %vm117, %v181, 0
    %201 = vmatprep.subr.bf16.mxu0 0
    %202 = vmatpush1.bf16.msra.mxu0 %v194
    %203 = vmatprep.subr.bf16.mxu0 0
    %204 = vmatpush1.bf16.msra.mxu0 %v195
    %205 = vmatprep.subr.bf16.mxu0 0
    %206 = vmatpush1.bf16.msra.mxu0 0
    %207 = vmatprep.subr.bf16.mxu0 0
    %208 = vmatpush1.bf16.msra.mxu0 0
    %209 = vmatprep.subr.bf16.mxu0 0
    %210 = vmatpush1.bf16.msra.mxu0 0
    %211 = vmatprep.subr.bf16.mxu0 0
    %212 = vmatpush1.bf16.msra.mxu0 0
    %213 = vmatprep.subr.bf16.mxu0 0
    %214 = vmatpush1.bf16.msra.mxu0 0
    %215 = vmatprep.subr.bf16.mxu0 0
    %216 = vmatpush1.bf16.msra.mxu0 0
    %217 = vmatprep.subr.bf16.mxu0 0
    %218 = vmatpush1.bf16.msra.mxu0 0
    %219 = vmatprep.subr.bf16.mxu0 0
    %220 = vmatpush1.bf16.msra.mxu0 0
    %221 = vmatprep.subr.bf16.mxu0 0
    %222 = vmatpush1.bf16.msra.mxu0 0
    %223 = vmatprep.subr.bf16.mxu0 0
    %224 = vmatpush1.bf16.msra.mxu0 0
    %225 = vmatprep.subr.bf16.mxu0 0
    %226 = vmatpush1.bf16.msra.mxu0 0
    %227 = vmatprep.subr.bf16.mxu0 0
    %228 = vmatpush1.bf16.msra.mxu0 0
    %229 = vmatprep.subr.bf16.mxu0 0
    %230 = vmatpush1.bf16.msra.mxu0 0
    %231 = vmatprep.subr.bf16.mxu0 0
    %232 = vmatpush1.bf16.msra.mxu0 0
    %233 = vmatprep.mubr.bf16.mxu0 0
    %234 = vmatmul.mubr.bf16.gmra.mrb[0].mxu0 %v199
    %v235 = vpop.f32.mrb[0].mxu0
    %v236 = vadd.f32 0.0, %v235
    %v237 = vpop.f32.mrb[0].mxu0
    %v238 = vpop.f32.mrb[0].mxu0
    %v239 = vadd.f32 0.0, %v238
    %v240 = vpop.f32.mrb[0].mxu0
    %241 = vdwg.mxu0
    %vm242 = vcmask 523264
    %v243 = vsel %vm242, %v236, 0.0
    %v244 = vsel %vm242, %v239, 0.0
    %v245 = vadd.f32 %v243, %v244
    %v246 = vrot.slane %v245, 4
    %v247 = vadd.f32 %v245, %v246
    %v248 = vrot.slane %v247, 2
    %v249 = vadd.f32 %v247, %v248
    %v250 = vrot.slane %v249, 1
    %v251 = vadd.f32 %v249, %v250
    %v252 = vmul.f32 %v236, %v236
    %v253 = vmul.f32 %v239, %v239
    %v254 = vsel %vm242, %v252, 0.0
    %v255 = vsel %vm242, %v253, 0.0
    %v256 = vadd.f32 %v254, %v255
    %v257 = vrot.slane %v256, 4
    %v258 = vadd.f32 %v256, %v257
    %v259 = vrot.slane %v258, 2
    %v260 = vadd.f32 %v258, %v259
    %v261 = vrot.slane %v260, 1
    %v262 = vadd.f32 %v260, %v261
    %v263 = vmul.f32 %v251, 0.125
    %v264 = vmul.f32 %v262, 0.125
    %v265 = vmul.f32 %v263, %v263
    %v266 = vsub.f32 %v264, %v265
    %v267 = vld [vmem:[%s6] sm:$0x1]
    %v268 = vadd.f32 %v266, 1e-05
    %v269 = vrsqrt.pop %v268
    %v270 = vmul.f32 %v267, %v269
    %v271 = vld [vmem:[%s7] sm:$0x1]
    %v272 = vmul.f32 %v263, %v270
    %v273 = vsub.f32 %v271, %v272
    %v275 = vlaneseq
    %v276 = vshrl.u32 %v275, 7
    %v277 = vsub.s32 0, %v276
    %v278 = vrot.slane %v270, %v277
    %v280 = vmul.f32 %v236, %v278
    %v281 = vmul.f32 %v239, %v278
    %v283 = vlaneseq
    %v284 = vshrl.u32 %v283, 7
    %v285 = vsub.s32 0, %v284
    %v286 = vrot.slane %v273, %v285
    %v288 = vadd.f32 %v280, %v286
    %v289 = vadd.f32 %v281, %v286
    %v290 = vmax.f32 %v288, 0.0
    %v291 = vmax.f32 %v289, 0.0
    %v292 = vmul.f32 %v290, %v172
    %v293 = vmul.f32 %v291, %v177
    %v294 = vpack.c.bf16 %v293, %v292
    %v295 = vld [vmem:[%s8] sm:$0xf]
    %v296 = vld [vmem:[%s8 + $0x4] sm:$0xf]
    %v297 = vld [vmem:[%s8 + $0x8] sm:$0xf]
    %v298 = vld [vmem:[%s8 + $0xc] sm:$0xf]
    %v299 = vld [vmem:[%s8 + $0x10] sm:$0xf]
    %v300 = vld [vmem:[%s8 + $0x14] sm:$0xf]
    %v301 = vld [vmem:[%s8 + $0x18] sm:$0xf]
    %v302 = vld [vmem:[%s8 + $0x1c] sm:$0xf]
    %v311 = vunpack.c.l.b16 %v295
    %v312 = vunpack.c.l.b16 %v296
    %v313 = vunpack.c.l.b16 %v297
    %v314 = vunpack.c.l.b16 %v298
    %v315 = vunpack.c.l.b16 %v299
    %v316 = vunpack.c.l.b16 %v300
    %v317 = vunpack.c.l.b16 %v301
    %v318 = vunpack.c.l.b16 %v302
    %v319 = vpack.c.b16 %v312, %v311
    %v320 = vpack.c.b16 %v314, %v313
    %v321 = vpack.c.b16 %v316, %v315
    %v322 = vpack.c.b16 %v318, %v317
    %v328 = vsel %vm242, %v294, 0
    %330 = vmatprep.subr.bf16.mxu0 0
    %331 = vmatpush1.bf16.msra.mxu0 %v319
    %332 = vmatprep.subr.bf16.mxu0 0
    %333 = vmatpush1.bf16.msra.mxu0 %v320
    %334 = vmatprep.subr.bf16.mxu0 0
    %335 = vmatpush1.bf16.msra.mxu0 %v321
    %336 = vmatprep.subr.bf16.mxu0 0
    %337 = vmatpush1.bf16.msra.mxu0 %v322
    %338 = vmatprep.subr.bf16.mxu0 0
    %339 = vmatpush1.bf16.msra.mxu0 0
    %340 = vmatprep.subr.bf16.mxu0 0
    %341 = vmatpush1.bf16.msra.mxu0 0
    %342 = vmatprep.subr.bf16.mxu0 0
    %343 = vmatpush1.bf16.msra.mxu0 0
    %344 = vmatprep.subr.bf16.mxu0 0
    %345 = vmatpush1.bf16.msra.mxu0 0
    %346 = vmatprep.subr.bf16.mxu0 0
    %347 = vmatpush1.bf16.msra.mxu0 0
    %348 = vmatprep.subr.bf16.mxu0 0
    %349 = vmatpush1.bf16.msra.mxu0 0
    %350 = vmatprep.subr.bf16.mxu0 0
    %351 = vmatpush1.bf16.msra.mxu0 0
    %352 = vmatprep.subr.bf16.mxu0 0
    %353 = vmatpush1.bf16.msra.mxu0 0
    %354 = vmatprep.subr.bf16.mxu0 0
    %355 = vmatpush1.bf16.msra.mxu0 0
    %356 = vmatprep.subr.bf16.mxu0 0
    %357 = vmatpush1.bf16.msra.mxu0 0
    %358 = vmatprep.subr.bf16.mxu0 0
    %359 = vmatpush1.bf16.msra.mxu0 0
    %360 = vmatprep.subr.bf16.mxu0 0
    %361 = vmatpush1.bf16.msra.mxu0 0
    %362 = vmatprep.mubr.bf16.mxu0 0
    %363 = vmatmul.mubr.bf16.gmra.mrb[0].mxu0 %v328
    %v364 = vpop.f32.mrb[0].mxu0
    %v365 = vadd.f32 0.0, %v364
    %v366 = vpop.f32.mrb[0].mxu0
    %v367 = vpop.f32.mrb[0].mxu0
    %v368 = vadd.f32 0.0, %v367
    %v369 = vpop.f32.mrb[0].mxu0
    %370 = vdwg.mxu0
    %v371 = vadd.f32 %v365, %v368
    %v372 = vrot.slane %v371, 4
    %v373 = vadd.f32 %v371, %v372
    %v374 = vrot.slane %v373, 2
    %v375 = vadd.f32 %v373, %v374
    %v376 = vrot.slane %v375, 1
    %v377 = vadd.f32 %v375, %v376
    %v378 = vmul.f32 %v365, %v365
    %v379 = vmul.f32 %v368, %v368
    %v380 = vadd.f32 %v378, %v379
    %v381 = vrot.slane %v380, 4
    %v382 = vadd.f32 %v380, %v381
    %v383 = vrot.slane %v382, 2
    %v384 = vadd.f32 %v382, %v383
    %v385 = vrot.slane %v384, 1
    %v386 = vadd.f32 %v384, %v385
    %v387 = vmul.f32 %v377, 0.125
    %v388 = vmul.f32 %v386, 0.125
    %v389 = vmul.f32 %v387, %v387
    %v390 = vsub.f32 %v388, %v389
    %v391 = vld [vmem:[%s9] sm:$0x1]
    %v392 = vadd.f32 %v390, 1e-05
    %v393 = vrsqrt.pop %v392
    %v394 = vmul.f32 %v391, %v393
    %v395 = vld [vmem:[%s10] sm:$0x1]
    %v396 = vmul.f32 %v387, %v394
    %v397 = vsub.f32 %v395, %v396
    %v399 = vlaneseq
    %v400 = vshrl.u32 %v399, 7
    %v401 = vsub.s32 0, %v400
    %v402 = vrot.slane %v394, %v401
    %v404 = vmul.f32 %v365, %v402
    %v405 = vmul.f32 %v368, %v402
    %v407 = vlaneseq
    %v408 = vshrl.u32 %v407, 7
    %v409 = vsub.s32 0, %v408
    %v410 = vrot.slane %v397, %v409
    %v412 = vadd.f32 %v404, %v410
    %v413 = vadd.f32 %v405, %v410
    %v414 = vmax.f32 %v412, 0.0
    %v415 = vmax.f32 %v413, 0.0
    %v416 = vmul.f32 %v414, %v172
    %v417 = vmul.f32 %v415, %v177
    %v418 = vpack.c.bf16 %v417, %v416
    %v419 = vld [vmem:[%s11] sm:$0xff]
    %v420 = vld [vmem:[%s11 + $0x8] sm:$0xff]
    %v421 = vld [vmem:[%s11 + $0x10] sm:$0xff]
    %v422 = vld [vmem:[%s11 + $0x18] sm:$0xff]
    %v423 = vld [vmem:[%s11 + $0x20] sm:$0xff]
    %v424 = vld [vmem:[%s11 + $0x28] sm:$0xff]
    %v425 = vld [vmem:[%s11 + $0x30] sm:$0xff]
    %v426 = vld [vmem:[%s11 + $0x38] sm:$0xff]
    %v427 = vld [vmem:[%s11 + $0x40] sm:$0xff]
    %v428 = vld [vmem:[%s11 + $0x48] sm:$0xff]
    %v429 = vld [vmem:[%s11 + $0x50] sm:$0xff]
    %v430 = vld [vmem:[%s11 + $0x58] sm:$0xff]
    %v431 = vld [vmem:[%s11 + $0x60] sm:$0xff]
    %v432 = vld [vmem:[%s11 + $0x68] sm:$0xff]
    %v433 = vld [vmem:[%s11 + $0x70] sm:$0xff]
    %v434 = vld [vmem:[%s11 + $0x78] sm:$0xff]
    %v451 = vunpack.c.l.b16 %v419
    %v452 = vunpack.c.h.b16 %v419
    %v453 = vunpack.c.l.b16 %v420
    %v454 = vunpack.c.h.b16 %v420
    %v455 = vunpack.c.l.b16 %v421
    %v456 = vunpack.c.h.b16 %v421
    %v457 = vunpack.c.l.b16 %v422
    %v458 = vunpack.c.h.b16 %v422
    %v459 = vunpack.c.l.b16 %v423
    %v460 = vunpack.c.h.b16 %v423
    %v461 = vunpack.c.l.b16 %v424
    %v462 = vunpack.c.h.b16 %v424
    %v463 = vunpack.c.l.b16 %v425
    %v464 = vunpack.c.h.b16 %v425
    %v465 = vunpack.c.l.b16 %v426
    %v466 = vunpack.c.h.b16 %v426
    %v467 = vunpack.c.l.b16 %v427
    %v468 = vunpack.c.h.b16 %v427
    %v469 = vunpack.c.l.b16 %v428
    %v470 = vunpack.c.h.b16 %v428
    %v471 = vunpack.c.l.b16 %v429
    %v472 = vunpack.c.h.b16 %v429
    %v473 = vunpack.c.l.b16 %v430
    %v474 = vunpack.c.h.b16 %v430
    %v475 = vunpack.c.l.b16 %v431
    %v476 = vunpack.c.h.b16 %v431
    %v477 = vunpack.c.l.b16 %v432
    %v478 = vunpack.c.h.b16 %v432
    %v479 = vunpack.c.l.b16 %v433
    %v480 = vunpack.c.h.b16 %v433
    %v481 = vunpack.c.l.b16 %v434
    %v482 = vunpack.c.h.b16 %v434
    %v483 = vpack.c.b16 %v453, %v451
    %v484 = vpack.c.b16 %v454, %v452
    %v485 = vpack.c.b16 %v457, %v455
    %v486 = vpack.c.b16 %v458, %v456
    %v487 = vpack.c.b16 %v461, %v459
    %v488 = vpack.c.b16 %v462, %v460
    %v489 = vpack.c.b16 %v465, %v463
    %v490 = vpack.c.b16 %v466, %v464
    %v491 = vpack.c.b16 %v469, %v467
    %v492 = vpack.c.b16 %v470, %v468
    %v493 = vpack.c.b16 %v473, %v471
    %v494 = vpack.c.b16 %v474, %v472
    %v495 = vpack.c.b16 %v477, %v475
    %v496 = vpack.c.b16 %v478, %v476
    %v497 = vpack.c.b16 %v481, %v479
    %v498 = vpack.c.b16 %v482, %v480
    %515 = vmatprep.subr.bf16.mxu0 %v484
    %516 = vmatpush1.bf16.msra.mxu0 %v483
    %517 = vmatprep.subr.bf16.mxu0 %v486
    %518 = vmatpush1.bf16.msra.mxu0 %v485
    %519 = vmatprep.subr.bf16.mxu0 %v488
    %520 = vmatpush1.bf16.msra.mxu0 %v487
    %521 = vmatprep.subr.bf16.mxu0 %v490
    %522 = vmatpush1.bf16.msra.mxu0 %v489
    %523 = vmatprep.subr.bf16.mxu0 %v492
    %524 = vmatpush1.bf16.msra.mxu0 %v491
    %525 = vmatprep.subr.bf16.mxu0 %v494
    %526 = vmatpush1.bf16.msra.mxu0 %v493
    %527 = vmatprep.subr.bf16.mxu0 %v496
    %528 = vmatpush1.bf16.msra.mxu0 %v495
    %529 = vmatprep.subr.bf16.mxu0 %v498
    %530 = vmatpush1.bf16.msra.mxu0 %v497
    %531 = vmatprep.subr.bf16.mxu0 0
    %532 = vmatpush1.bf16.msra.mxu0 0
    %533 = vmatprep.subr.bf16.mxu0 0
    %534 = vmatpush1.bf16.msra.mxu0 0
    %535 = vmatprep.subr.bf16.mxu0 0
    %536 = vmatpush1.bf16.msra.mxu0 0
    %537 = vmatprep.subr.bf16.mxu0 0
    %538 = vmatpush1.bf16.msra.mxu0 0
    %539 = vmatprep.subr.bf16.mxu0 0
    %540 = vmatpush1.bf16.msra.mxu0 0
    %541 = vmatprep.subr.bf16.mxu0 0
    %542 = vmatpush1.bf16.msra.mxu0 0
    %543 = vmatprep.subr.bf16.mxu0 0
    %544 = vmatpush1.bf16.msra.mxu0 0
    %545 = vmatprep.subr.bf16.mxu0 0
    %546 = vmatpush1.bf16.msra.mxu0 0
    %547 = vmatprep.mubr.bf16.mxu0 0
    %548 = vmatmul.mubr.bf16.gmra.mrb[0].mxu0 %v418
    %v549 = vpop.f32.mrb[0].mxu0
    %v550 = vadd.f32 0.0, %v549
    %v551 = vpop.f32.mrb[0].mxu0
    %v552 = vadd.f32 0.0, %v551
    %v553 = vpop.f32.mrb[0].mxu0
    %v554 = vadd.f32 0.0, %v553
    %v555 = vpop.f32.mrb[0].mxu0
    %v556 = vadd.f32 0.0, %v555
    %557 = vdwg.mxu0
    %v558 = vadd.f32 %v550, %v554
    %v559 = vrot.slane %v558, 4
    %v560 = vadd.f32 %v558, %v559
    %v561 = vrot.slane %v560, 2
    %v562 = vadd.f32 %v560, %v561
    %v563 = vrot.slane %v562, 1
    %v564 = vadd.f32 %v562, %v563
    %v565 = vadd.f32 %v552, %v556
    %v566 = vrot.slane %v565, 4
    %v567 = vadd.f32 %v565, %v566
    %v568 = vrot.slane %v567, 2
    %v569 = vadd.f32 %v567, %v568
    %v570 = vrot.slane %v569, 1
    %v571 = vadd.f32 %v569, %v570
    %v572 = vmul.f32 %v550, %v550
    %v573 = vmul.f32 %v552, %v552
    %v574 = vmul.f32 %v554, %v554
    %v575 = vmul.f32 %v556, %v556
    %v576 = vadd.f32 %v572, %v574
    %v577 = vrot.slane %v576, 4
    %v578 = vadd.f32 %v576, %v577
    %v579 = vrot.slane %v578, 2
    %v580 = vadd.f32 %v578, %v579
    %v581 = vrot.slane %v580, 1
    %v582 = vadd.f32 %v580, %v581
    %v583 = vadd.f32 %v573, %v575
    %v584 = vrot.slane %v583, 4
    %v585 = vadd.f32 %v583, %v584
    %v586 = vrot.slane %v585, 2
    %v587 = vadd.f32 %v585, %v586
    %v588 = vrot.slane %v587, 1
    %v589 = vadd.f32 %v587, %v588
    %v590 = vmul.f32 %v564, 0.125
    %v591 = vmul.f32 %v571, 0.125
    %v592 = vmul.f32 %v582, 0.125
    %v593 = vmul.f32 %v589, 0.125
    %v594 = vmul.f32 %v590, %v590
    %v595 = vmul.f32 %v591, %v591
    %v596 = vsub.f32 %v592, %v594
    %v597 = vsub.f32 %v593, %v595
    %v598 = vld [vmem:[%s12] sm:$0x3]
    %v599 = vadd.f32 %v596, 1e-05
    %v600 = vadd.f32 %v597, 1e-05
    %v601 = vrsqrt.pop %v599
    %v602 = vrsqrt.pop %v600
    %v605 = vcombine.low %v601, %v602
    %v607 = vunpack.c.l.s4 1966171168
    %v608 = vunpack.c.0.s8 %v607
    %v609 = vlaneseq
    %v610 = vshrl.u32 %v609, 7
    %v611 = vsub.s32 %v608, %v610
    %v612 = vrot.slane %v605, %v611
    %v614 = vunpack.c.l.s4 1966171168
    %v615 = vunpack.c.0.s8 %v614
    %v616 = vlaneseq
    %v617 = vshrl.u32 %v616, 7
    %v618 = vsub.s32 %v615, %v617
    %v619 = vrot.slane %v612, %v618
    %v621 = vmul.f32 %v598, %v619
    %v622 = vld [vmem:[%s13] sm:$0x3]
    %v624 = vlaneseq
    %v625 = vshrl.u32 %v624, 7
    %v626 = vsub.s32 0, %v625
    %v627 = vrot.slane %v621, %v626
    %v628 = vlaneseq
    %v629 = vshrl.u32 %v628, 7
    %v630 = vsub.s32 1, %v629
    %v631 = vrot.slane %v621, %v630
    %v634 = vmul.f32 %v590, %v627
    %v635 = vmul.f32 %v591, %v631
    %v638 = vcombine.low %v634, %v635
    %v640 = vunpack.c.l.s4 1966171168
    %v641 = vunpack.c.0.s8 %v640
    %v642 = vlaneseq
    %v643 = vshrl.u32 %v642, 7
    %v644 = vsub.s32 %v641, %v643
    %v645 = vrot.slane %v638, %v644
    %v647 = vunpack.c.l.s4 1966171168
    %v648 = vunpack.c.0.s8 %v647
    %v649 = vlaneseq
    %v650 = vshrl.u32 %v649, 7
    %v651 = vsub.s32 %v648, %v650
    %v652 = vrot.slane %v645, %v651
    %v654 = vsub.f32 %v622, %v652
    %v655 = vmul.f32 %v550, %v627
    %v656 = vmul.f32 %v552, %v631
    %v657 = vmul.f32 %v554, %v627
    %v658 = vmul.f32 %v556, %v631
    %v660 = vlaneseq
    %v661 = vshrl.u32 %v660, 7
    %v662 = vsub.s32 0, %v661
    %v663 = vrot.slane %v654, %v662
    %v664 = vlaneseq
    %v665 = vshrl.u32 %v664, 7
    %v666 = vsub.s32 1, %v665
    %v667 = vrot.slane %v654, %v666
    %v670 = vadd.f32 %v655, %v663
    %v671 = vadd.f32 %v656, %v667
    %v672 = vadd.f32 %v657, %v663
    %v673 = vadd.f32 %v658, %v667
    %v674 = vmax.f32 %v670, 0.0
    %v675 = vmax.f32 %v671, 0.0
    %v676 = vmax.f32 %v672, 0.0
    %v677 = vmax.f32 %v673, 0.0
    %v678 = vmul.f32 %v674, %v172
    %v679 = vmul.f32 %v675, %v172
    %v680 = vmul.f32 %v676, %v177
    %v681 = vmul.f32 %v677, %v177
    %v682 = vpack.c.bf16 %v680, %v678
    %v683 = vpack.c.bf16 %v681, %v679
    %684 = vst [vmem:[#allocation2] sm:$0xff] %v682
    %685 = vst [vmem:[#allocation2 + $0x8] sm:$0xff] %v683
  $region69: #{generator_forward.1} parent=0 // pred_fallthru
    _
  %v686 = vld [vmem:[#allocation2] sm:$0xff]
  %v687 = vld [vmem:[#allocation2 + $0x8] sm:$0xff]
  %v688 = vld [vmem:[%s14] sm:$0xf]
  %v689 = vld [vmem:[%s14 + $0x4] sm:$0xf]
  %v690 = vld [vmem:[%s14 + $0x8] sm:$0xf]
  %v691 = vld [vmem:[%s14 + $0xc] sm:$0xf]
  %v692 = vld [vmem:[%s14 + $0x10] sm:$0xf]
  %v693 = vld [vmem:[%s14 + $0x14] sm:$0xf]
  %v694 = vld [vmem:[%s14 + $0x18] sm:$0xf]
  %v695 = vld [vmem:[%s14 + $0x1c] sm:$0xf]
  %v696 = vld [vmem:[%s14 + $0x20] sm:$0xf]
  %v697 = vld [vmem:[%s14 + $0x24] sm:$0xf]
  %v698 = vld [vmem:[%s14 + $0x28] sm:$0xf]
  %v699 = vld [vmem:[%s14 + $0x2c] sm:$0xf]
  %v700 = vld [vmem:[%s14 + $0x30] sm:$0xf]
  %v701 = vld [vmem:[%s14 + $0x34] sm:$0xf]
  %v702 = vld [vmem:[%s14 + $0x38] sm:$0xf]
  %v703 = vld [vmem:[%s14 + $0x3c] sm:$0xf]
  %v704 = vld [vmem:[%s14 + $0x40] sm:$0xf]
  %v705 = vld [vmem:[%s14 + $0x44] sm:$0xf]
  %v706 = vld [vmem:[%s14 + $0x48] sm:$0xf]
  %v707 = vld [vmem:[%s14 + $0x4c] sm:$0xf]
  %v708 = vld [vmem:[%s14 + $0x50] sm:$0xf]
  %v709 = vld [vmem:[%s14 + $0x54] sm:$0xf]
  %v710 = vld [vmem:[%s14 + $0x58] sm:$0xf]
  %v711 = vld [vmem:[%s14 + $0x5c] sm:$0xf]
  %v712 = vld [vmem:[%s14 + $0x60] sm:$0xf]
  %v713 = vld [vmem:[%s14 + $0x64] sm:$0xf]
  %v714 = vld [vmem:[%s14 + $0x68] sm:$0xf]
  %v715 = vld [vmem:[%s14 + $0x6c] sm:$0xf]
  %v716 = vld [vmem:[%s14 + $0x70] sm:$0xf]
  %v717 = vld [vmem:[%s14 + $0x74] sm:$0xf]
  %v718 = vld [vmem:[%s14 + $0x78] sm:$0xf]
  %v719 = vld [vmem:[%s14 + $0x7c] sm:$0xf]
  %v720 = vld [vmem:[%s15] sm:$0x1]
  %v722 = vlaneseq
  %v723 = vshrl.u32 %v722, 7
  %v724 = vsub.s32 0, %v723
  %v725 = vrot.slane %v720, %v724
  %v759 = vunpack.c.l.b16 %v688
  %v760 = vunpack.c.l.b16 %v689
  %v761 = vunpack.c.l.b16 %v690
  %v762 = vunpack.c.l.b16 %v691
  %v763 = vunpack.c.l.b16 %v692
  %v764 = vunpack.c.l.b16 %v693
  %v765 = vunpack.c.l.b16 %v694
  %v766 = vunpack.c.l.b16 %v695
  %v767 = vunpack.c.l.b16 %v696
  %v768 = vunpack.c.l.b16 %v697
  %v769 = vunpack.c.l.b16 %v698
  %v770 = vunpack.c.l.b16 %v699
  %v771 = vunpack.c.l.b16 %v700
  %v772 = vunpack.c.l.b16 %v701
  %v773 = vunpack.c.l.b16 %v702
  %v774 = vunpack.c.l.b16 %v703
  %v775 = vunpack.c.l.b16 %v704
  %v776 = vunpack.c.l.b16 %v705
  %v777 = vunpack.c.l.b16 %v706
  %v778 = vunpack.c.l.b16 %v707
  %v779 = vunpack.c.l.b16 %v708
  %v780 = vunpack.c.l.b16 %v709
  %v781 = vunpack.c.l.b16 %v710
  %v782 = vunpack.c.l.b16 %v711
  %v783 = vunpack.c.l.b16 %v712
  %v784 = vunpack.c.l.b16 %v713
  %v785 = vunpack.c.l.b16 %v714
  %v786 = vunpack.c.l.b16 %v715
  %v787 = vunpack.c.l.b16 %v716
  %v788 = vunpack.c.l.b16 %v717
  %v789 = vunpack.c.l.b16 %v718
  %v790 = vunpack.c.l.b16 %v719
  %v791 = vpack.c.b16 %v760, %v759
  %v792 = vpack.c.b16 %v762, %v761
  %v793 = vpack.c.b16 %v764, %v763
  %v794 = vpack.c.b16 %v766, %v765
  %v795 = vpack.c.b16 %v768, %v767
  %v796 = vpack.c.b16 %v770, %v769
  %v797 = vpack.c.b16 %v772, %v771
  %v798 = vpack.c.b16 %v774, %v773
  %v799 = vpack.c.b16 %v776, %v775
  %v800 = vpack.c.b16 %v778, %v777
  %v801 = vpack.c.b16 %v780, %v779
  %v802 = vpack.c.b16 %v782, %v781
  %v803 = vpack.c.b16 %v784, %v783
  %v804 = vpack.c.b16 %v786, %v785
  %v805 = vpack.c.b16 %v788, %v787
  %v806 = vpack.c.b16 %v790, %v789
  %823 = vmatprep.subr.bf16.mxu0 0
  %824 = vmatpush1.bf16.msra.mxu0 %v791
  %825 = vmatprep.subr.bf16.mxu0 0
  %826 = vmatpush1.bf16.msra.mxu0 %v792
  %827 = vmatprep.subr.bf16.mxu0 0
  %828 = vmatpush1.bf16.msra.mxu0 %v793
  %829 = vmatprep.subr.bf16.mxu0 0
  %830 = vmatpush1.bf16.msra.mxu0 %v794
  %831 = vmatprep.subr.bf16.mxu0 0
  %832 = vmatpush1.bf16.msra.mxu0 %v795
  %833 = vmatprep.subr.bf16.mxu0 0
  %834 = vmatpush1.bf16.msra.mxu0 %v796
  %835 = vmatprep.subr.bf16.mxu0 0
  %836 = vmatpush1.bf16.msra.mxu0 %v797
  %837 = vmatprep.subr.bf16.mxu0 0
  %838 = vmatpush1.bf16.msra.mxu0 %v798
  %839 = vmatprep.subr.bf16.mxu0 0
  %840 = vmatpush1.bf16.msra.mxu0 %v799
  %841 = vmatprep.subr.bf16.mxu0 0
  %842 = vmatpush1.bf16.msra.mxu0 %v800
  %843 = vmatprep.subr.bf16.mxu0 0
  %844 = vmatpush1.bf16.msra.mxu0 %v801
  %845 = vmatprep.subr.bf16.mxu0 0
  %846 = vmatpush1.bf16.msra.mxu0 %v802
  %847 = vmatprep.subr.bf16.mxu0 0
  %848 = vmatpush1.bf16.msra.mxu0 %v803
  %849 = vmatprep.subr.bf16.mxu0 0
  %850 = vmatpush1.bf16.msra.mxu0 %v804
  %851 = vmatprep.subr.bf16.mxu0 0
  %852 = vmatpush1.bf16.msra.mxu0 %v805
  %853 = vmatprep.subr.bf16.mxu0 0
  %854 = vmatpush1.bf16.msra.mxu0 %v806
  %855 = vmatprep.mubr.bf16.mxu0 %v687
  %856 = vmatmul.mubr.bf16.gmra.mrb[0].mxu0 %v686
  %v857 = vpop.f32.mrb[0].mxu0
  %v858 = vadd.f32 %v725, %v857
  %v859 = vpop.f32.mrb[0].mxu0
  %v860 = vpop.f32.mrb[0].mxu0
  %v861 = vadd.f32 %v725, %v860
  %v862 = vpop.f32.mrb[0].mxu0
  %863 = vdwg.mxu0
  %v864 = vxor.u32 %v858, 2147483648
  %v865 = vxor.u32 %v861, 2147483648
  %v866 = vmul.f32 %v864, 1.442695
  %v867 = vpow.pop %v866
  %v868 = vmul.f32 %v865, 1.442695
  %v869 = vpow.pop %v868
  %v870 = vadd.f32 %v867, 1.0
  %v871 = vadd.f32 %v869, 1.0
  %v872 = vrcp.pop %v870
  %v873 = vmul.f32 1.0, %v872
  %v874 = vrcp.pop %v871
  %v875 = vmul.f32 1.0, %v874
  %876 = vst [vmem:[%s16] sm:$0xff] %v873
  %877 = vst [vmem:[%s16 + $0x8] sm:$0xff] %v875
  // Predicated region
  $region70: #{generator_forward.1} parent=0 // pred_check
    _
  $region71: #{generator_forward.1} parent=0 // pred_check_branch
    %879 = sbr.rel (0) target = $region73
  $region72: #{generator_forward.1} parent=0 // pred_region
    _
  $region73: #{generator_forward.1} parent=0 // pred_fallthru
    _
  // Predicated region
  $region74: #{generator_forward.1} parent=0 // pred_check
    _
  $region75: #{generator_forward.1} parent=0 // pred_check_branch
    %881 = sbr.rel (0) target = $region77
  $region76: #{generator_forward.1} parent=0 // pred_region
    _
  $region77: #{generator_forward.1} parent=0 // pred_fallthru
    _

</llo_original>
